<compile_context>
chip_gen: v6e
topology: v6e:2x2x1
jax: 0.10.0
libtpu: 0.0.40
codegen_flags: <defaults>
</compile_context>

<pallas_src>
import functools

import jax
import jax.numpy as jnp
import numpy as np
from jax.experimental import pallas as pl
from jax.experimental.pallas import tpu as pltpu

EPS = 1e-5
LANE = 128


def _ds_basic_conv_kernel(x_ref, w_ref, gb_ref, o_ref, *, m_valid):
    """One block of c_blk output channels.

    x_ref : (W_out, C_in, Mp)   f32 VMEM  (Mp = lane-padded N*H_out, pad = 0)
    w_ref : (1, c_blk, C_in)    f32       (depthwise scale folded into pointwise weights)
    gb_ref: (1, c_blk, 2)       f32       (BatchNorm2d gamma in [:, 0], beta in [:, 1])
    o_ref : (W_out, c_blk, Mp)  f32
    """
    w_out = o_ref.shape[0]
    wmat = w_ref[0]                                                  # (c_blk, C_in)

    # Pointwise 1x1 conv on the MXU, one W_out row at a time (W_out is small and static).
    # Biases are omitted: per-channel constants are cancelled exactly by the per-row
    # LayerNorm mean subtraction (the module builds a fresh LN each forward: w=1, b=0).
    rows = [
        jnp.dot(wmat, x_ref[w], preferred_element_type=jnp.float32)  # (c_blk, Mp)
        for w in range(w_out)
    ]

    # LayerNorm over the last spatial dim (W_out), i.e. per (channel, n*h) row.
    # Padded Mp lanes are zero in x, hence zero in every row -> they stay exactly zero
    # through LN and contribute nothing to the BN statistics below.
    inv_w = 1.0 / w_out
    mu = rows[0]
    for w in range(1, w_out):
        mu = mu + rows[w]
    mu = mu * inv_w                                                  # (c_blk, Mp)
    cent = [r - mu for r in rows]
    var = cent[0] * cent[0]
    for w in range(1, w_out):
        var = var + cent[w] * cent[w]
    var = var * inv_w
    rstd = jax.lax.rsqrt(var + EPS)
    ln = [c * rstd for c in cent]                                    # pad lanes stay zero

    # BatchNorm2d (training mode): per-channel batch stats over (N, H_out, W_out), biased
    # variance.  LN output rows have ~zero mean, so the channel mean is ~0 and is dropped
    # (exact because the module's LayerNorm is always fresh: weight=1, bias=0).
    bsq = jnp.sum(ln[0] * ln[0], axis=-1, keepdims=True)
    for w in range(1, w_out):
        bsq = bsq + jnp.sum(ln[w] * ln[w], axis=-1, keepdims=True)
    bvar = bsq * (1.0 / (m_valid * w_out))                           # (c_blk, 1)

    gb = gb_ref[0]                                                   # (c_blk, 2)
    gamma = gb[:, 0:1]
    beta = gb[:, 1:2]
    scale = gamma * jax.lax.rsqrt(bvar + EPS)

    # BN affine + ReLU; lane-dense stores, one W_out row at a time.
    for w in range(w_out):
        o_ref[w] = jnp.maximum(ln[w] * scale + beta, 0.0)


def _choose_c_blk(c_out, c_in, w_out, mp):
    """Channel-block width from a conservative VMEM budget (fits v7x's 32 MiB scoped)."""
    bpe = 4
    budget = 24 * 1024 * 1024
    # Resident x (double-buffered by default) + per-channel cost: double-buffered output
    # block plus ~3-4 block-sized live temporaries (rows / cent / ln).
    x_bytes = 2 * w_out * max(c_in, 8) * mp * bpe
    per_chan = 6 * w_out * mp * bpe
    avail = budget - x_bytes
    fit = max(1, avail // per_chan) if avail > 0 else 1
    if c_out <= 8:
        return c_out                                   # single block == full channel dim
    tgt = max(8, -(-c_out // 8))                       # aim for ~8 channel-block grid steps
    c_blk = min(int(fit), tgt)
    c_blk = max(8, (c_blk // 8) * 8)                   # multiple of 8 (channel axis = sublanes)
    return min(c_blk, -(-c_out // 8) * 8)


def ds_basic_conv_forward(x, params, *, stride=2, padding=1):
    """x: (N, C_in, H, W) float32 (NCHW). Returns (N, C_out, H_out, W_out)."""
    n, c_in, h, w = x.shape
    s, p = stride, padding
    h_out = (h + 2 * p - 1) // s + 1
    w_out = (w + 2 * p - 1) // s + 1
    c_out = params["w_pt"].shape[0]
    m = n * h_out
    mp = ((m + LANE - 1) // LANE) * LANE               # lane-dense minor dim

    # Spatial part of the (1,1)-kernel depthwise conv: zero-pad + stride-s subsample, then
    # lay out as (W_out, C_in, Mp) with M = N*H_out on the lane axis (zero lane padding).
    # TODO(synk): for realistic H/W, do this gather in-kernel from an HBM ref
    # (memory_space=pl.ANY + strided pl.ds / make_async_copy) or enable allow_input_fusion,
    # instead of materializing XLA pad/slice/transpose copies here.
    x_pad = jnp.pad(x, ((0, 0), (0, 0), (p, p), (p, p)))
    xg = x_pad[:, :, : h_out * s : s, : w_out * s : s]               # (N, C_in, Ho, Wo)
    xg = jnp.transpose(xg, (3, 1, 0, 2)).reshape(w_out, c_in, m)     # (Wo, C_in, M)
    xg = jnp.pad(xg.astype(jnp.float32), ((0, 0), (0, 0), (0, mp - m)))
    # TODO(synk): on v6e, stream xg (and the output) as bf16 with f32 accumulation in-kernel
    # to halve HBM traffic; keep f32 on v5e (no bf16 VALU/EUP).

    # Fold the depthwise 1x1 conv into the pointwise weights; drop all additive biases
    # (cancelled by the fresh LayerNorm's per-row mean subtraction).
    w_eff = (params["w_pt"] * params["w_dw"][None, :]).astype(jnp.float32)   # (C_out, C_in)
    gamma = params["bn_gamma"].astype(jnp.float32)
    beta = params["bn_beta"].astype(jnp.float32)

    # Channel-block tiling (grid over blocks of output channels).
    c_blk = _choose_c_blk(c_out, c_in, w_out, mp)
    nblk = -(-c_out // c_blk)
    c_pad = nblk * c_blk
    if c_pad != c_out:
        w_eff = jnp.pad(w_eff, ((0, c_pad - c_out), (0, 0)))
        gamma = jnp.pad(gamma, (0, c_pad - c_out))
        beta = jnp.pad(beta, (0, c_pad - c_out))
    w_eff = w_eff.reshape(nblk, c_blk, c_in)
    gb = jnp.stack([gamma, beta], axis=-1).reshape(nblk, c_blk, 2)

    # TODO(synk): for very large N*H_out, add an M-tiled two-pass BatchNorm (per-channel
    # sum-of-squares scratch, M grid axis marked "arbitrary") so blocks fit v7x's 64 MiB.
    # TODO(synk): x never rotates across the grid; single-buffer it (pipeline_mode=
    # pl.Buffered(1)) once that is load-bearing for VMEM — here it is counted 2x in the budget.
    # TODO(synk): on v7x use CORE_PARALLEL (or core_map) on the channel-block axis for an
    # explicit megacore split.
    out = pl.pallas_call(
        functools.partial(_ds_basic_conv_kernel, m_valid=m),
        out_shape=jax.ShapeDtypeStruct((w_out, c_pad, mp), jnp.float32),
        grid_spec=pltpu.PrefetchScalarGridSpec(
            num_scalar_prefetch=0,
            grid=(nblk,),
            in_specs=[
                pl.BlockSpec((w_out, c_in, mp), lambda j: (0, 0, 0)),     # x resident
                pl.BlockSpec((1, c_blk, c_in), lambda j: (j, 0, 0)),      # weights block
                pl.BlockSpec((1, c_blk, 2), lambda j: (j, 0, 0)),         # gamma/beta block
            ],
            out_specs=pl.BlockSpec((w_out, c_blk, mp), lambda j: (0, j, 0)),
        ),
        compiler_params=pltpu.CompilerParams(
            dimension_semantics=("parallel",),
            vmem_limit_bytes=32 * 1024 * 1024,
        ),
    )(xg, w_eff, gb)

    out = out[:, :c_out, :m].reshape(w_out, c_out, n, h_out)
    return jnp.transpose(out, (2, 1, 3, 0))                              # NCHW


def _reference_forward(x, params, *, stride=2, padding=1):
    """Pure-JAX reference of the PyTorch forward (training-mode BatchNorm), with biases."""
    n, c_in, h, w = x.shape
    s, p = stride, padding
    h_out = (h + 2 * p - 1) // s + 1
    w_out = (w + 2 * p - 1) // s + 1
    x_pad = jnp.pad(x, ((0, 0), (0, 0), (p, p), (p, p)))
    xg = x_pad[:, :, : h_out * s : s, : w_out * s : s]                   # (N, C_in, Ho, Wo)
    dw = xg * params["w_dw"][None, :, None, None] + params["b_dw"][None, :, None, None]
    pt = jnp.einsum("oc,nchw->nohw", params["w_pt"], dw) + params["b_pt"][None, :, None, None]
    mu = jnp.mean(pt, axis=-1, keepdims=True)
    var = jnp.mean((pt - mu) ** 2, axis=-1, keepdims=True)
    ln = (pt - mu) / jnp.sqrt(var + EPS)
    bmu = jnp.mean(ln, axis=(0, 2, 3), keepdims=True)
    bvar = jnp.mean((ln - bmu) ** 2, axis=(0, 2, 3), keepdims=True)
    bn = (ln - bmu) / jnp.sqrt(bvar + EPS)
    bn = bn * params["bn_gamma"][None, :, None, None] + params["bn_beta"][None, :, None, None]
    return jnp.maximum(bn, 0.0)


def init_params(key, c_in, c_out):
    k1, k2, k3, k4, k5, k6 = jax.random.split(key, 6)
    return {
        # deep_conv: Conv2d(c_in, c_in, (1,1), groups=c_in) -> weight (c_in,1,1,1), bias (c_in,)
        "w_dw": 0.5 * jax.random.normal(k1, (c_in,), jnp.float32),
        "b_dw": 0.1 * jax.random.normal(k2, (c_in,), jnp.float32),
        # point_conv: Conv2d(c_in, c_out, 1) -> weight (c_out,c_in,1,1), bias (c_out,)
        "w_pt": 0.5 * jax.random.normal(k3, (c_out, c_in), jnp.float32),
        "b_pt": 0.1 * jax.random.normal(k4, (c_out,), jnp.float32),
        # BatchNorm2d affine parameters (perturbed from the PyTorch init to exercise them)
        "bn_gamma": 1.0 + 0.1 * jax.random.normal(k5, (c_out,), jnp.float32),
        "bn_beta": 0.1 * jax.random.normal(k6, (c_out,), jnp.float32),
    }


if __name__ == "__main__":
    key = jax.random.PRNGKey(0)
    k_x, k_p = jax.random.split(key)

    N, C_IN, C_OUT, H, W = 2, 4, 32, 16, 16
    x = jax.random.normal(k_x, (N, C_IN, H, W), jnp.float32)
    params = init_params(k_p, C_IN, C_OUT)

    out = jax.block_until_ready(ds_basic_conv_forward(x, params))
    ref = jax.block_until_ready(_reference_forward(x, params))
    np.testing.assert_allclose(np.asarray(out), np.asarray(ref), rtol=1e-3, atol=1e-3)
    assert out.shape == (N, C_OUT, 9, 9), out.shape

    # TODO(synk): BatchNorm running-stat updates (a training-time side effect) are not
    # modeled; only the forward output is reproduced.
    print("KERNEL_OK")
</pallas_src>

<mosaic_0001>
module attributes {stable_mosaic.version = 11 : i64} {
  func.func @_ds_basic_conv_kernel(%arg0: i32, %arg1: memref<9x4x128xf32, #tpu.memory_space<vmem>>, %arg2: memref<1x8x4xf32, #tpu.memory_space<vmem>>, %arg3: memref<1x8x2xf32, #tpu.memory_space<vmem>>, %arg4: memref<9x8x128xf32, #tpu.memory_space<vmem>>) attributes {dimension_semantics = [#tpu.dimension_semantics<parallel>], iteration_bounds = array<i64: 4>, scalar_prefetch = 0 : i64, scratch_operands = 0 : i64, tpu.core_type = #tpu.core_type<tc>, window_params = [{pipeline_mode = #tpu.pipeline_mode<synchronous>, transform_indices = @transform_0, window_bounds = array<i64: 9, 4, 128>}, {transform_indices = @transform_1, window_bounds = array<i64: 1, 8, 4>}, {transform_indices = @transform_2, window_bounds = array<i64: 1, 8, 2>}, {transform_indices = @transform_3, window_bounds = array<i64: 9, 8, 128>}]} {
    %c0 = arith.constant 0 : index
    %c0_0 = arith.constant 0 : index
    %c0_1 = arith.constant 0 : index
    %0 = vector.load %arg2[%c0, %c0_0, %c0_1] : memref<1x8x4xf32, #tpu.memory_space<vmem>>, vector<1x8x4xf32>
    %1 = vector.shape_cast %0 : vector<1x8x4xf32> to vector<8x4xf32>
    %c0_2 = arith.constant 0 : index
    %c0_3 = arith.constant 0 : index
    %c0_4 = arith.constant 0 : index
    %2 = vector.load %arg1[%c0_2, %c0_3, %c0_4] : memref<9x4x128xf32, #tpu.memory_space<vmem>>, vector<1x4x128xf32>
    %3 = vector.shape_cast %2 : vector<1x4x128xf32> to vector<4x128xf32>
    %cst = arith.constant dense<0.000000e+00> : vector<8x128xf32>
    %4 = tpu.matmul %1, %3, %cst {dimension_numbers = #tpu.dot_dimension_numbers<[1], [0], [0], [1], [0, 0, 1, 1], [], []>} : vector<8x4xf32>, vector<4x128xf32>, vector<8x128xf32> -> vector<8x128xf32>
    %c1 = arith.constant 1 : index
    %c0_5 = arith.constant 0 : index
    %c0_6 = arith.constant 0 : index
    %5 = vector.load %arg1[%c1, %c0_5, %c0_6] : memref<9x4x128xf32, #tpu.memory_space<vmem>>, vector<1x4x128xf32>
    %6 = vector.shape_cast %5 : vector<1x4x128xf32> to vector<4x128xf32>
    %cst_7 = arith.constant dense<0.000000e+00> : vector<8x128xf32>
    %7 = tpu.matmul %1, %6, %cst_7 {dimension_numbers = #tpu.dot_dimension_numbers<[1], [0], [0], [1], [0, 0, 1, 1], [], []>} : vector<8x4xf32>, vector<4x128xf32>, vector<8x128xf32> -> vector<8x128xf32>
    %c2 = arith.constant 2 : index
    %c0_8 = arith.constant 0 : index
    %c0_9 = arith.constant 0 : index
    %8 = vector.load %arg1[%c2, %c0_8, %c0_9] : memref<9x4x128xf32, #tpu.memory_space<vmem>>, vector<1x4x128xf32>
    %9 = vector.shape_cast %8 : vector<1x4x128xf32> to vector<4x128xf32>
    %cst_10 = arith.constant dense<0.000000e+00> : vector<8x128xf32>
    %10 = tpu.matmul %1, %9, %cst_10 {dimension_numbers = #tpu.dot_dimension_numbers<[1], [0], [0], [1], [0, 0, 1, 1], [], []>} : vector<8x4xf32>, vector<4x128xf32>, vector<8x128xf32> -> vector<8x128xf32>
    %c3 = arith.constant 3 : index
    %c0_11 = arith.constant 0 : index
    %c0_12 = arith.constant 0 : index
    %11 = vector.load %arg1[%c3, %c0_11, %c0_12] : memref<9x4x128xf32, #tpu.memory_space<vmem>>, vector<1x4x128xf32>
    %12 = vector.shape_cast %11 : vector<1x4x128xf32> to vector<4x128xf32>
    %cst_13 = arith.constant dense<0.000000e+00> : vector<8x128xf32>
    %13 = tpu.matmul %1, %12, %cst_13 {dimension_numbers = #tpu.dot_dimension_numbers<[1], [0], [0], [1], [0, 0, 1, 1], [], []>} : vector<8x4xf32>, vector<4x128xf32>, vector<8x128xf32> -> vector<8x128xf32>
    %c4 = arith.constant 4 : index
    %c0_14 = arith.constant 0 : index
    %c0_15 = arith.constant 0 : index
    %14 = vector.load %arg1[%c4, %c0_14, %c0_15] : memref<9x4x128xf32, #tpu.memory_space<vmem>>, vector<1x4x128xf32>
    %15 = vector.shape_cast %14 : vector<1x4x128xf32> to vector<4x128xf32>
    %cst_16 = arith.constant dense<0.000000e+00> : vector<8x128xf32>
    %16 = tpu.matmul %1, %15, %cst_16 {dimension_numbers = #tpu.dot_dimension_numbers<[1], [0], [0], [1], [0, 0, 1, 1], [], []>} : vector<8x4xf32>, vector<4x128xf32>, vector<8x128xf32> -> vector<8x128xf32>
    %c5 = arith.constant 5 : index
    %c0_17 = arith.constant 0 : index
    %c0_18 = arith.constant 0 : index
    %17 = vector.load %arg1[%c5, %c0_17, %c0_18] : memref<9x4x128xf32, #tpu.memory_space<vmem>>, vector<1x4x128xf32>
    %18 = vector.shape_cast %17 : vector<1x4x128xf32> to vector<4x128xf32>
    %cst_19 = arith.constant dense<0.000000e+00> : vector<8x128xf32>
    %19 = tpu.matmul %1, %18, %cst_19 {dimension_numbers = #tpu.dot_dimension_numbers<[1], [0], [0], [1], [0, 0, 1, 1], [], []>} : vector<8x4xf32>, vector<4x128xf32>, vector<8x128xf32> -> vector<8x128xf32>
    %c6 = arith.constant 6 : index
    %c0_20 = arith.constant 0 : index
    %c0_21 = arith.constant 0 : index
    %20 = vector.load %arg1[%c6, %c0_20, %c0_21] : memref<9x4x128xf32, #tpu.memory_space<vmem>>, vector<1x4x128xf32>
    %21 = vector.shape_cast %20 : vector<1x4x128xf32> to vector<4x128xf32>
    %cst_22 = arith.constant dense<0.000000e+00> : vector<8x128xf32>
    %22 = tpu.matmul %1, %21, %cst_22 {dimension_numbers = #tpu.dot_dimension_numbers<[1], [0], [0], [1], [0, 0, 1, 1], [], []>} : vector<8x4xf32>, vector<4x128xf32>, vector<8x128xf32> -> vector<8x128xf32>
    %c7 = arith.constant 7 : index
    %c0_23 = arith.constant 0 : index
    %c0_24 = arith.constant 0 : index
    %23 = vector.load %arg1[%c7, %c0_23, %c0_24] : memref<9x4x128xf32, #tpu.memory_space<vmem>>, vector<1x4x128xf32>
    %24 = vector.shape_cast %23 : vector<1x4x128xf32> to vector<4x128xf32>
    %cst_25 = arith.constant dense<0.000000e+00> : vector<8x128xf32>
    %25 = tpu.matmul %1, %24, %cst_25 {dimension_numbers = #tpu.dot_dimension_numbers<[1], [0], [0], [1], [0, 0, 1, 1], [], []>} : vector<8x4xf32>, vector<4x128xf32>, vector<8x128xf32> -> vector<8x128xf32>
    %c8 = arith.constant 8 : index
    %c0_26 = arith.constant 0 : index
    %c0_27 = arith.constant 0 : index
    %26 = vector.load %arg1[%c8, %c0_26, %c0_27] : memref<9x4x128xf32, #tpu.memory_space<vmem>>, vector<1x4x128xf32>
    %27 = vector.shape_cast %26 : vector<1x4x128xf32> to vector<4x128xf32>
    %cst_28 = arith.constant dense<0.000000e+00> : vector<8x128xf32>
    %28 = tpu.matmul %1, %27, %cst_28 {dimension_numbers = #tpu.dot_dimension_numbers<[1], [0], [0], [1], [0, 0, 1, 1], [], []>} : vector<8x4xf32>, vector<4x128xf32>, vector<8x128xf32> -> vector<8x128xf32>
    %29 = arith.addf %4, %7 : vector<8x128xf32>
    %30 = arith.addf %29, %10 : vector<8x128xf32>
    %31 = arith.addf %30, %13 : vector<8x128xf32>
    %32 = arith.addf %31, %16 : vector<8x128xf32>
    %33 = arith.addf %32, %19 : vector<8x128xf32>
    %34 = arith.addf %33, %22 : vector<8x128xf32>
    %35 = arith.addf %34, %25 : vector<8x128xf32>
    %36 = arith.addf %35, %28 : vector<8x128xf32>
    %cst_29 = arith.constant 0.111111112 : f32
    %37 = vector.broadcast %cst_29 : f32 to vector<8x128xf32>
    %38 = arith.mulf %36, %37 : vector<8x128xf32>
    %39 = arith.subf %4, %38 : vector<8x128xf32>
    %40 = arith.subf %7, %38 : vector<8x128xf32>
    %41 = arith.subf %10, %38 : vector<8x128xf32>
    %42 = arith.subf %13, %38 : vector<8x128xf32>
    %43 = arith.subf %16, %38 : vector<8x128xf32>
    %44 = arith.subf %19, %38 : vector<8x128xf32>
    %45 = arith.subf %22, %38 : vector<8x128xf32>
    %46 = arith.subf %25, %38 : vector<8x128xf32>
    %47 = arith.subf %28, %38 : vector<8x128xf32>
    %48 = arith.mulf %39, %39 : vector<8x128xf32>
    %49 = arith.mulf %40, %40 : vector<8x128xf32>
    %50 = arith.addf %48, %49 : vector<8x128xf32>
    %51 = arith.mulf %41, %41 : vector<8x128xf32>
    %52 = arith.addf %50, %51 : vector<8x128xf32>
    %53 = arith.mulf %42, %42 : vector<8x128xf32>
    %54 = arith.addf %52, %53 : vector<8x128xf32>
    %55 = arith.mulf %43, %43 : vector<8x128xf32>
    %56 = arith.addf %54, %55 : vector<8x128xf32>
    %57 = arith.mulf %44, %44 : vector<8x128xf32>
    %58 = arith.addf %56, %57 : vector<8x128xf32>
    %59 = arith.mulf %45, %45 : vector<8x128xf32>
    %60 = arith.addf %58, %59 : vector<8x128xf32>
    %61 = arith.mulf %46, %46 : vector<8x128xf32>
    %62 = arith.addf %60, %61 : vector<8x128xf32>
    %63 = arith.mulf %47, %47 : vector<8x128xf32>
    %64 = arith.addf %62, %63 : vector<8x128xf32>
    %cst_30 = arith.constant 0.111111112 : f32
    %65 = vector.broadcast %cst_30 : f32 to vector<8x128xf32>
    %66 = arith.mulf %64, %65 : vector<8x128xf32>
    %cst_31 = arith.constant 9.99999974E-6 : f32
    %67 = vector.broadcast %cst_31 : f32 to vector<8x128xf32>
    %68 = arith.addf %66, %67 : vector<8x128xf32>
    %69 = math.rsqrt %68 : vector<8x128xf32>
    %70 = arith.mulf %39, %69 : vector<8x128xf32>
    %71 = arith.mulf %40, %69 : vector<8x128xf32>
    %72 = arith.mulf %41, %69 : vector<8x128xf32>
    %73 = arith.mulf %42, %69 : vector<8x128xf32>
    %74 = arith.mulf %43, %69 : vector<8x128xf32>
    %75 = arith.mulf %44, %69 : vector<8x128xf32>
    %76 = arith.mulf %45, %69 : vector<8x128xf32>
    %77 = arith.mulf %46, %69 : vector<8x128xf32>
    %78 = arith.mulf %47, %69 : vector<8x128xf32>
    %79 = arith.mulf %70, %70 : vector<8x128xf32>
    %cst_32 = arith.constant dense<0.000000e+00> : vector<8xf32>
    %80 = vector.multi_reduction <add>, %79, %cst_32 [1] : vector<8x128xf32> to vector<8xf32>
    %81 = vector.shape_cast %80 : vector<8xf32> to vector<8x1xf32>
    %82 = arith.mulf %71, %71 : vector<8x128xf32>
    %cst_33 = arith.constant dense<0.000000e+00> : vector<8xf32>
    %83 = vector.multi_reduction <add>, %82, %cst_33 [1] : vector<8x128xf32> to vector<8xf32>
    %84 = vector.shape_cast %83 : vector<8xf32> to vector<8x1xf32>
    %85 = arith.addf %81, %84 : vector<8x1xf32>
    %86 = arith.mulf %72, %72 : vector<8x128xf32>
    %cst_34 = arith.constant dense<0.000000e+00> : vector<8xf32>
    %87 = vector.multi_reduction <add>, %86, %cst_34 [1] : vector<8x128xf32> to vector<8xf32>
    %88 = vector.shape_cast %87 : vector<8xf32> to vector<8x1xf32>
    %89 = arith.addf %85, %88 : vector<8x1xf32>
    %90 = arith.mulf %73, %73 : vector<8x128xf32>
    %cst_35 = arith.constant dense<0.000000e+00> : vector<8xf32>
    %91 = vector.multi_reduction <add>, %90, %cst_35 [1] : vector<8x128xf32> to vector<8xf32>
    %92 = vector.shape_cast %91 : vector<8xf32> to vector<8x1xf32>
    %93 = arith.addf %89, %92 : vector<8x1xf32>
    %94 = arith.mulf %74, %74 : vector<8x128xf32>
    %cst_36 = arith.constant dense<0.000000e+00> : vector<8xf32>
    %95 = vector.multi_reduction <add>, %94, %cst_36 [1] : vector<8x128xf32> to vector<8xf32>
    %96 = vector.shape_cast %95 : vector<8xf32> to vector<8x1xf32>
    %97 = arith.addf %93, %96 : vector<8x1xf32>
    %98 = arith.mulf %75, %75 : vector<8x128xf32>
    %cst_37 = arith.constant dense<0.000000e+00> : vector<8xf32>
    %99 = vector.multi_reduction <add>, %98, %cst_37 [1] : vector<8x128xf32> to vector<8xf32>
    %100 = vector.shape_cast %99 : vector<8xf32> to vector<8x1xf32>
    %101 = arith.addf %97, %100 : vector<8x1xf32>
    %102 = arith.mulf %76, %76 : vector<8x128xf32>
    %cst_38 = arith.constant dense<0.000000e+00> : vector<8xf32>
    %103 = vector.multi_reduction <add>, %102, %cst_38 [1] : vector<8x128xf32> to vector<8xf32>
    %104 = vector.shape_cast %103 : vector<8xf32> to vector<8x1xf32>
    %105 = arith.addf %101, %104 : vector<8x1xf32>
    %106 = arith.mulf %77, %77 : vector<8x128xf32>
    %cst_39 = arith.constant dense<0.000000e+00> : vector<8xf32>
    %107 = vector.multi_reduction <add>, %106, %cst_39 [1] : vector<8x128xf32> to vector<8xf32>
    %108 = vector.shape_cast %107 : vector<8xf32> to vector<8x1xf32>
    %109 = arith.addf %105, %108 : vector<8x1xf32>
    %110 = arith.mulf %78, %78 : vector<8x128xf32>
    %cst_40 = arith.constant dense<0.000000e+00> : vector<8xf32>
    %111 = vector.multi_reduction <add>, %110, %cst_40 [1] : vector<8x128xf32> to vector<8xf32>
    %112 = vector.shape_cast %111 : vector<8xf32> to vector<8x1xf32>
    %113 = arith.addf %109, %112 : vector<8x1xf32>
    %cst_41 = arith.constant 0.00617283955 : f32
    %114 = vector.broadcast %cst_41 : f32 to vector<8x1xf32>
    %115 = arith.mulf %113, %114 : vector<8x1xf32>
    %c0_42 = arith.constant 0 : index
    %c0_43 = arith.constant 0 : index
    %c0_44 = arith.constant 0 : index
    %116 = vector.load %arg3[%c0_42, %c0_43, %c0_44] : memref<1x8x2xf32, #tpu.memory_space<vmem>>, vector<1x8x2xf32>
    %117 = vector.shape_cast %116 : vector<1x8x2xf32> to vector<8x2xf32>
    %118 = vector.extract_strided_slice %117 {offsets = [0, 0], sizes = [8, 1], strides = [1, 1]} : vector<8x2xf32> to vector<8x1xf32>
    %119 = vector.extract_strided_slice %117 {offsets = [0, 1], sizes = [8, 1], strides = [1, 1]} : vector<8x2xf32> to vector<8x1xf32>
    %cst_45 = arith.constant 9.99999974E-6 : f32
    %120 = vector.broadcast %cst_45 : f32 to vector<8x1xf32>
    %121 = arith.addf %115, %120 : vector<8x1xf32>
    %122 = math.rsqrt %121 : vector<8x1xf32>
    %123 = arith.mulf %118, %122 : vector<8x1xf32>
    %124 = vector.broadcast %123 : vector<8x1xf32> to vector<8x128xf32>
    %125 = arith.mulf %70, %124 : vector<8x128xf32>
    %126 = vector.broadcast %119 : vector<8x1xf32> to vector<8x128xf32>
    %127 = arith.addf %125, %126 : vector<8x128xf32>
    %cst_46 = arith.constant 0.000000e+00 : f32
    %128 = vector.broadcast %cst_46 : f32 to vector<8x128xf32>
    %129 = arith.maximumf %127, %128 : vector<8x128xf32>
    %c0_47 = arith.constant 0 : index
    %c0_48 = arith.constant 0 : index
    %c0_49 = arith.constant 0 : index
    %130 = vector.load %arg4[%c0_47, %c0_48, %c0_49] : memref<9x8x128xf32, #tpu.memory_space<vmem>>, vector<1x8x128xf32>
    %131 = vector.shape_cast %130 : vector<1x8x128xf32> to vector<8x128xf32>
    %132 = vector.shape_cast %129 : vector<8x128xf32> to vector<1x8x128xf32>
    tpu.vector_store %arg4[%c0_47, %c0_48, %c0_49], %132 {strides = array<i32>} : memref<9x8x128xf32, #tpu.memory_space<vmem>>, vector<1x8x128xf32>,
    %133 = vector.broadcast %123 : vector<8x1xf32> to vector<8x128xf32>
    %134 = arith.mulf %71, %133 : vector<8x128xf32>
    %135 = vector.broadcast %119 : vector<8x1xf32> to vector<8x128xf32>
    %136 = arith.addf %134, %135 : vector<8x128xf32>
    %cst_50 = arith.constant 0.000000e+00 : f32
    %137 = vector.broadcast %cst_50 : f32 to vector<8x128xf32>
    %138 = arith.maximumf %136, %137 : vector<8x128xf32>
    %c1_51 = arith.constant 1 : index
    %c0_52 = arith.constant 0 : index
    %c0_53 = arith.constant 0 : index
    %139 = vector.load %arg4[%c1_51, %c0_52, %c0_53] : memref<9x8x128xf32, #tpu.memory_space<vmem>>, vector<1x8x128xf32>
    %140 = vector.shape_cast %139 : vector<1x8x128xf32> to vector<8x128xf32>
    %141 = vector.shape_cast %138 : vector<8x128xf32> to vector<1x8x128xf32>
    tpu.vector_store %arg4[%c1_51, %c0_52, %c0_53], %141 {strides = array<i32>} : memref<9x8x128xf32, #tpu.memory_space<vmem>>, vector<1x8x128xf32>,
    %142 = vector.broadcast %123 : vector<8x1xf32> to vector<8x128xf32>
    %143 = arith.mulf %72, %142 : vector<8x128xf32>
    %144 = vector.broadcast %119 : vector<8x1xf32> to vector<8x128xf32>
    %145 = arith.addf %143, %144 : vector<8x128xf32>
    %cst_54 = arith.constant 0.000000e+00 : f32
    %146 = vector.broadcast %cst_54 : f32 to vector<8x128xf32>
    %147 = arith.maximumf %145, %146 : vector<8x128xf32>
    %c2_55 = arith.constant 2 : index
    %c0_56 = arith.constant 0 : index
    %c0_57 = arith.constant 0 : index
    %148 = vector.load %arg4[%c2_55, %c0_56, %c0_57] : memref<9x8x128xf32, #tpu.memory_space<vmem>>, vector<1x8x128xf32>
    %149 = vector.shape_cast %148 : vector<1x8x128xf32> to vector<8x128xf32>
    %150 = vector.shape_cast %147 : vector<8x128xf32> to vector<1x8x128xf32>
    tpu.vector_store %arg4[%c2_55, %c0_56, %c0_57], %150 {strides = array<i32>} : memref<9x8x128xf32, #tpu.memory_space<vmem>>, vector<1x8x128xf32>,
    %151 = vector.broadcast %123 : vector<8x1xf32> to vector<8x128xf32>
    %152 = arith.mulf %73, %151 : vector<8x128xf32>
    %153 = vector.broadcast %119 : vector<8x1xf32> to vector<8x128xf32>
    %154 = arith.addf %152, %153 : vector<8x128xf32>
    %cst_58 = arith.constant 0.000000e+00 : f32
    %155 = vector.broadcast %cst_58 : f32 to vector<8x128xf32>
    %156 = arith.maximumf %154, %155 : vector<8x128xf32>
    %c3_59 = arith.constant 3 : index
    %c0_60 = arith.constant 0 : index
    %c0_61 = arith.constant 0 : index
    %157 = vector.load %arg4[%c3_59, %c0_60, %c0_61] : memref<9x8x128xf32, #tpu.memory_space<vmem>>, vector<1x8x128xf32>
    %158 = vector.shape_cast %157 : vector<1x8x128xf32> to vector<8x128xf32>
    %159 = vector.shape_cast %156 : vector<8x128xf32> to vector<1x8x128xf32>
    tpu.vector_store %arg4[%c3_59, %c0_60, %c0_61], %159 {strides = array<i32>} : memref<9x8x128xf32, #tpu.memory_space<vmem>>, vector<1x8x128xf32>,
    %160 = vector.broadcast %123 : vector<8x1xf32> to vector<8x128xf32>
    %161 = arith.mulf %74, %160 : vector<8x128xf32>
    %162 = vector.broadcast %119 : vector<8x1xf32> to vector<8x128xf32>
    %163 = arith.addf %161, %162 : vector<8x128xf32>
    %cst_62 = arith.constant 0.000000e+00 : f32
    %164 = vector.broadcast %cst_62 : f32 to vector<8x128xf32>
    %165 = arith.maximumf %163, %164 : vector<8x128xf32>
    %c4_63 = arith.constant 4 : index
    %c0_64 = arith.constant 0 : index
    %c0_65 = arith.constant 0 : index
    %166 = vector.load %arg4[%c4_63, %c0_64, %c0_65] : memref<9x8x128xf32, #tpu.memory_space<vmem>>, vector<1x8x128xf32>
    %167 = vector.shape_cast %166 : vector<1x8x128xf32> to vector<8x128xf32>
    %168 = vector.shape_cast %165 : vector<8x128xf32> to vector<1x8x128xf32>
    tpu.vector_store %arg4[%c4_63, %c0_64, %c0_65], %168 {strides = array<i32>} : memref<9x8x128xf32, #tpu.memory_space<vmem>>, vector<1x8x128xf32>,
    %169 = vector.broadcast %123 : vector<8x1xf32> to vector<8x128xf32>
    %170 = arith.mulf %75, %169 : vector<8x128xf32>
    %171 = vector.broadcast %119 : vector<8x1xf32> to vector<8x128xf32>
    %172 = arith.addf %170, %171 : vector<8x128xf32>
    %cst_66 = arith.constant 0.000000e+00 : f32
    %173 = vector.broadcast %cst_66 : f32 to vector<8x128xf32>
    %174 = arith.maximumf %172, %173 : vector<8x128xf32>
    %c5_67 = arith.constant 5 : index
    %c0_68 = arith.constant 0 : index
    %c0_69 = arith.constant 0 : index
    %175 = vector.load %arg4[%c5_67, %c0_68, %c0_69] : memref<9x8x128xf32, #tpu.memory_space<vmem>>, vector<1x8x128xf32>
    %176 = vector.shape_cast %175 : vector<1x8x128xf32> to vector<8x128xf32>
    %177 = vector.shape_cast %174 : vector<8x128xf32> to vector<1x8x128xf32>
    tpu.vector_store %arg4[%c5_67, %c0_68, %c0_69], %177 {strides = array<i32>} : memref<9x8x128xf32, #tpu.memory_space<vmem>>, vector<1x8x128xf32>,
    %178 = vector.broadcast %123 : vector<8x1xf32> to vector<8x128xf32>
    %179 = arith.mulf %76, %178 : vector<8x128xf32>
    %180 = vector.broadcast %119 : vector<8x1xf32> to vector<8x128xf32>
    %181 = arith.addf %179, %180 : vector<8x128xf32>
    %cst_70 = arith.constant 0.000000e+00 : f32
    %182 = vector.broadcast %cst_70 : f32 to vector<8x128xf32>
    %183 = arith.maximumf %181, %182 : vector<8x128xf32>
    %c6_71 = arith.constant 6 : index
    %c0_72 = arith.constant 0 : index
    %c0_73 = arith.constant 0 : index
    %184 = vector.load %arg4[%c6_71, %c0_72, %c0_73] : memref<9x8x128xf32, #tpu.memory_space<vmem>>, vector<1x8x128xf32>
    %185 = vector.shape_cast %184 : vector<1x8x128xf32> to vector<8x128xf32>
    %186 = vector.shape_cast %183 : vector<8x128xf32> to vector<1x8x128xf32>
    tpu.vector_store %arg4[%c6_71, %c0_72, %c0_73], %186 {strides = array<i32>} : memref<9x8x128xf32, #tpu.memory_space<vmem>>, vector<1x8x128xf32>,
    %187 = vector.broadcast %123 : vector<8x1xf32> to vector<8x128xf32>
    %188 = arith.mulf %77, %187 : vector<8x128xf32>
    %189 = vector.broadcast %119 : vector<8x1xf32> to vector<8x128xf32>
    %190 = arith.addf %188, %189 : vector<8x128xf32>
    %cst_74 = arith.constant 0.000000e+00 : f32
    %191 = vector.broadcast %cst_74 : f32 to vector<8x128xf32>
    %192 = arith.maximumf %190, %191 : vector<8x128xf32>
    %c7_75 = arith.constant 7 : index
    %c0_76 = arith.constant 0 : index
    %c0_77 = arith.constant 0 : index
    %193 = vector.load %arg4[%c7_75, %c0_76, %c0_77] : memref<9x8x128xf32, #tpu.memory_space<vmem>>, vector<1x8x128xf32>
    %194 = vector.shape_cast %193 : vector<1x8x128xf32> to vector<8x128xf32>
    %195 = vector.shape_cast %192 : vector<8x128xf32> to vector<1x8x128xf32>
    tpu.vector_store %arg4[%c7_75, %c0_76, %c0_77], %195 {strides = array<i32>} : memref<9x8x128xf32, #tpu.memory_space<vmem>>, vector<1x8x128xf32>,
    %196 = vector.broadcast %123 : vector<8x1xf32> to vector<8x128xf32>
    %197 = arith.mulf %78, %196 : vector<8x128xf32>
    %198 = vector.broadcast %119 : vector<8x1xf32> to vector<8x128xf32>
    %199 = arith.addf %197, %198 : vector<8x128xf32>
    %cst_78 = arith.constant 0.000000e+00 : f32
    %200 = vector.broadcast %cst_78 : f32 to vector<8x128xf32>
    %201 = arith.maximumf %199, %200 : vector<8x128xf32>
    %c8_79 = arith.constant 8 : index
    %c0_80 = arith.constant 0 : index
    %c0_81 = arith.constant 0 : index
    %202 = vector.load %arg4[%c8_79, %c0_80, %c0_81] : memref<9x8x128xf32, #tpu.memory_space<vmem>>, vector<1x8x128xf32>
    %203 = vector.shape_cast %202 : vector<1x8x128xf32> to vector<8x128xf32>
    %204 = vector.shape_cast %201 : vector<8x128xf32> to vector<1x8x128xf32>
    tpu.vector_store %arg4[%c8_79, %c0_80, %c0_81], %204 {strides = array<i32>} : memref<9x8x128xf32, #tpu.memory_space<vmem>>, vector<1x8x128xf32>,
    return
  }
  func.func @transform_0(%arg0: i32) -> (i32, i32, i32) {
    %c0_i32 = arith.constant 0 : i32
    %c0_i32_0 = arith.constant 0 : i32
    %c0_i32_1 = arith.constant 0 : i32
    %c0_i32_2 = arith.constant 0 : i32
    return %c0_i32, %c0_i32_0, %c0_i32_1 : i32, i32, i32
  }
  func.func @transform_1(%arg0: i32) -> (i32, i32, i32) {
    %c0_i32 = arith.constant 0 : i32
    %c0_i32_0 = arith.constant 0 : i32
    %c0_i32_1 = arith.constant 0 : i32
    return %arg0, %c0_i32, %c0_i32_0 : i32, i32, i32
  }
  func.func @transform_2(%arg0: i32) -> (i32, i32, i32) {
    %c0_i32 = arith.constant 0 : i32
    %c0_i32_0 = arith.constant 0 : i32
    %c0_i32_1 = arith.constant 0 : i32
    return %arg0, %c0_i32, %c0_i32_0 : i32, i32, i32
  }
  func.func @transform_3(%arg0: i32) -> (i32, i32, i32) {
    %c0_i32 = arith.constant 0 : i32
    %c0_i32_0 = arith.constant 0 : i32
    %c0_i32_1 = arith.constant 0 : i32
    return %c0_i32, %arg0, %c0_i32_0 : i32, i32, i32
  }
}

</mosaic_0001>

<llo_original>
// kernel: tpu_custom_call.1
$region0: #{tpu_custom_call.1}
  #allocation0 [shape = 'u32[]', space=smem, size = 0x4, offset = 0x4, fixed_abs, tag = 'smem constant byte address 0x4 - core index']
  #allocation1 [shape = 'u32[144,128]{1,0:T(1,128)}', space=vmem, size = 0x12000, scoped, tag = 'internal scratch']
  %s0 = inlined_call_operand.vmem [shape: f32[9,4,128], index: 0, kind: input, shape index: {}]
  %s1 = inlined_call_operand.vmem [shape: f32[4,8,4], index: 1, kind: input, shape index: {}]
  %s2 = inlined_call_operand.vmem [shape: f32[4,8,2], index: 2, kind: input, shape index: {}]
  %s3 = inlined_call_operand.hbm [shape: f32[9,32,128], index: 3, kind: output, shape index: {}]
  %s4 = sld [smem:[#allocation0]]
  $region45: #{tpu_custom_call.1} parent=0
    _
  %s6 = ssub.s32 1, %s4
  %s7 = scalar_select 0, %s6, %s4
  $region1: #{tpu_custom_call.1} parent=0
    #allocation2 [shape = 'u8[73728]{0}', space=vmem, size = 0x12000, scoped, tag = 'output window, operand 0']
    #allocation3 [shape = 's32[2]{0}', space=sflag, size = 0x8, scoped, tag = 'scoped memory for tpu_custom_call.1']
    %8 = vsyncpa [#allocation3], 0
    %s9 = scalar_lea.sflag [#allocation3], 1
    %10 = vsyncpa %s9, 0
    loop: start=0, step=1, limit=6
    $region2: #{tpu_custom_call.1} parent=1 // loop_pre_header
      _
    $region3: #{tpu_custom_call.1} parent=1 // loop_header
      %s12 = sphi 0, %s16
      %p13 = scmp.ge.s32.totalorder %s12, 6
      %s20 = sphi 0, %s20
      %s22 = sphi 0, %s20
      %s23 = sphi 0, %s22
      %s37 = sphi 0, %s23
      %s43 = sphi 0, %s45
      %s46 = sphi 0, %s43
      %s47 = sphi 0, %s46
      %s63 = sphi 0, %s47
      %s69 = sphi 0, %s71
      %s72 = sphi 0, %s69
      %s73 = sphi 0, %s72
      %s89 = sphi 0, %s73
      %s95 = sphi 0, %s97
      %s98 = sphi 0, %s95
      %s99 = sphi 0, %s98
      %s115 = sphi 0, %s99
    $region4: #{tpu_custom_call.1} parent=1 // loop_header_branch
      %15 = sbr.rel (%p13) target = $region8
    $region5: #{tpu_custom_call.1} parent=1 // loop_body
      %s17 = ssub.s32 %s12, 1
      %s18 = ssub.s32 %s12, 2
      %s19 = sadd.s32 %s12, 1
      %s21 = sadd.s32 %s20, 1
      %p24 = scmp.eq.s32.totalorder %s12, 3
      %p25 = scmp.ne.s32.totalorder %s20, %s22
      %p26 = scmp.eq.s32.totalorder %s12, 0
      %p27 = por %p25, %p26
      %p28 = scmp.ne.s32.totalorder %s20, %s22
      %p29 = scmp.eq.s32.totalorder %s17, 3
      %p30 = por %p28, %p29
      %p31 = scmp.ne.s32.totalorder %s22, %s23
      %p32 = scmp.eq.s32.totalorder %s17, 0
      %p33 = por %p31, %p32
      %p34 = scmp.ne.s32.totalorder %s22, %s23
      %p35 = scmp.eq.s32.totalorder %s18, 3
      %p36 = por %p34, %p35
      %p38 = scmp.ne.s32.totalorder %s23, %s37
      %p39 = scmp.eq.s32.totalorder %s18, 0
      %p40 = por %p38, %p39
      %s41 = ssub.s32 %s12, %s19
      %p42 = scmp.eq.s32.totalorder %s41, 0
      %s44 = sadd.s32 %s43, 1
      %s45 = scalar_select %p42, %s43, %s44
      %p48 = pneg %p42
      %p49 = scmp.eq.s32.totalorder %s12, 3
      %p50 = por %p48, %p49
      %p51 = scmp.ne.s32.totalorder %s43, %s46
      %p52 = scmp.eq.s32.totalorder %s12, 0
      %p53 = por %p51, %p52
      %p54 = scmp.ne.s32.totalorder %s43, %s46
      %p55 = scmp.eq.s32.totalorder %s17, 3
      %p56 = por %p54, %p55
      %p57 = scmp.ne.s32.totalorder %s46, %s47
      %p58 = scmp.eq.s32.totalorder %s17, 0
      %p59 = por %p57, %p58
      %p60 = scmp.ne.s32.totalorder %s46, %s47
      %p61 = scmp.eq.s32.totalorder %s18, 3
      %p62 = por %p60, %p61
      %p64 = scmp.ne.s32.totalorder %s47, %s63
      %p65 = scmp.eq.s32.totalorder %s18, 0
      %p66 = por %p64, %p65
      %s67 = ssub.s32 %s12, %s19
      %p68 = scmp.eq.s32.totalorder %s67, 0
      %s70 = sadd.s32 %s69, 1
      %s71 = scalar_select %p68, %s69, %s70
      %p74 = pneg %p68
      %p75 = scmp.eq.s32.totalorder %s12, 3
      %p76 = por %p74, %p75
      %p77 = scmp.ne.s32.totalorder %s69, %s72
      %p78 = scmp.eq.s32.totalorder %s12, 0
      %p79 = por %p77, %p78
      %p80 = scmp.ne.s32.totalorder %s69, %s72
      %p81 = scmp.eq.s32.totalorder %s17, 3
      %p82 = por %p80, %p81
      %p83 = scmp.ne.s32.totalorder %s72, %s73
      %p84 = scmp.eq.s32.totalorder %s17, 0
      %p85 = por %p83, %p84
      %p86 = scmp.ne.s32.totalorder %s72, %s73
      %p87 = scmp.eq.s32.totalorder %s18, 3
      %p88 = por %p86, %p87
      %p90 = scmp.ne.s32.totalorder %s73, %s89
      %p91 = scmp.eq.s32.totalorder %s18, 0
      %p92 = por %p90, %p91
      %s93 = ssub.s32 %s12, %s19
      %p94 = scmp.eq.s32.totalorder %s93, 0
      %s96 = sadd.s32 %s95, 1
      %s97 = scalar_select %p94, %s95, %s96
      %p100 = pneg %p94
      %p101 = scmp.eq.s32.totalorder %s12, 3
      %p102 = por %p100, %p101
      %p103 = scmp.ne.s32.totalorder %s95, %s98
      %p104 = scmp.eq.s32.totalorder %s12, 0
      %p105 = por %p103, %p104
      %p106 = scmp.ne.s32.totalorder %s95, %s98
      %p107 = scmp.eq.s32.totalorder %s17, 3
      %p108 = por %p106, %p107
      %p109 = scmp.ne.s32.totalorder %s98, %s99
      %p110 = scmp.eq.s32.totalorder %s17, 0
      %p111 = por %p109, %p110
      %p112 = scmp.ne.s32.totalorder %s98, %s99
      %p113 = scmp.eq.s32.totalorder %s18, 3
      %p114 = por %p112, %p113
      %p116 = scmp.ne.s32.totalorder %s99, %s115
      %p117 = scmp.eq.s32.totalorder %s18, 0
      %p118 = por %p116, %p117
      %p119 = scmp.le.s32.totalorder 1, %s12
      %p120 = scmp.lt.s32.totalorder %s12, 5
      %p121 = pnand %p119, %p120
      %p122 = pneg %p121
      // Predicated region
      $region9: #{tpu_custom_call.1} parent=5 // pred_check
        _
      $region10: #{tpu_custom_call.1} parent=5 // pred_check_branch
        %124 = sbr.rel (%p121) target = $region12
      $region11: #{tpu_custom_call.1} parent=5 // pred_region
        %s125 = ssub.s32 %s12, 1
        // Predicated region
        $region13: #{tpu_custom_call.1} parent=11 // pred_check
          %p126 = pneg %p33
        $region14: #{tpu_custom_call.1} parent=11 // pred_check_branch
          %128 = sbr.rel (%p126) target = $region16
        $region15: #{tpu_custom_call.1} parent=11 // pred_region
          _
        $region16: #{tpu_custom_call.1} parent=11 // pred_fallthru
          _
      $region12: #{tpu_custom_call.1} parent=5 // pred_fallthru
        _
      %p129 = scmp.lt.s32.totalorder %s12, 4
      // Predicated region
      $region17: #{tpu_custom_call.1} parent=5 // pred_check
        %p130 = pneg %p129
      $region18: #{tpu_custom_call.1} parent=5 // pred_check_branch
        %132 = sbr.rel (%p130) target = $region20
      $region19: #{tpu_custom_call.1} parent=5 // pred_region
        // Predicated region
        $region21: #{tpu_custom_call.1} parent=19 // pred_check
          %p133 = pneg %p53
        $region22: #{tpu_custom_call.1} parent=19 // pred_check_branch
          %135 = sbr.rel (%p133) target = $region24
        $region23: #{tpu_custom_call.1} parent=19 // pred_region
          %p136 = scmp.lt.s32.totalorder %s12, 3
          %s137 = scalar_select %p136, %s12, 3
          %s138 = smul.addr %s137, 8
          %s139 = scalar_lea.vmem %s1, %s138
        $region24: #{tpu_custom_call.1} parent=19 // pred_fallthru
          _
        // Predicated region
        $region25: #{tpu_custom_call.1} parent=19 // pred_check
          %p140 = pneg %p79
        $region26: #{tpu_custom_call.1} parent=19 // pred_check_branch
          %142 = sbr.rel (%p140) target = $region28
        $region27: #{tpu_custom_call.1} parent=19 // pred_region
          %p143 = scmp.lt.s32.totalorder %s12, 3
          %s144 = scalar_select %p143, %s12, 3
          %s145 = smul.addr %s144, 8
          %s146 = scalar_lea.vmem %s2, %s145
        $region28: #{tpu_custom_call.1} parent=19 // pred_fallthru
          _
      $region20: #{tpu_custom_call.1} parent=5 // pred_fallthru
        _
      %p147 = scmp.le.s32.totalorder 1, %s12
      %p148 = scmp.lt.s32.totalorder %s12, 5
      %p149 = pnand %p147, %p148
      %p150 = pneg %p149
      // Predicated region
      $region29: #{tpu_custom_call.1} parent=5 // pred_check
        _
      $region30: #{tpu_custom_call.1} parent=5 // pred_check_branch
        %152 = sbr.rel (%p149) target = $region32
      $region31: #{tpu_custom_call.1} parent=5 // pred_region
        %s153 = ssub.s32 %s12, 1
        %p154 = pneg %p33
        %p155 = pneg %p30
        %p156 = scmp.lt.s32.totalorder %s17, 3
        %s157 = scalar_select %p156, %s17, 3
        %s158 = smul.addr %s157, 8
        %s159 = scalar_lea.vmem %s1, %s158
        %p160 = pneg %p59
        %p161 = pneg %p56
        %p162 = scmp.lt.s32.totalorder %s17, 3
        %s163 = scalar_select %p162, %s17, 3
        %s164 = smul.addr %s163, 8
        %s165 = scalar_lea.vmem %s2, %s164
        %p166 = pneg %p85
        %p167 = pneg %p82
        %p168 = pneg %p111
        %p169 = pneg %p108
        %s170 = sand.u32 %s98, 1
        %s171 = scalar_lea.sflag [#allocation3], %s170
        %s172 = sand.u32 %s98, 1
        %s173 = smul.addr %s172, 72
        %s174 = scalar_lea.vmem [#allocation2], %s173
        %p175 = scmp.lt.s32.totalorder %s17, 3
        %s176 = scalar_select %p175, %s17, 3
        %s177 = smul.addr %s176, 8
        %s178 = scalar_lea.vmem %s1, %s177
        %p179 = scmp.lt.s32.totalorder %s17, 3
        %s180 = scalar_select %p179, %s17, 3
        %s181 = smul.addr %s180, 8
        %s182 = scalar_lea.vmem %s2, %s181
        %v183 = vld [vmem:[%s178] sm:$0xff]
        %v184 = vld [vmem:[%s0] sm:$0xf]
        %vm185 = vcmask 31744
        %v187 = vsel %vm185, %v183, 0
        %vm189 = vcmask 1043456
        %v191 = vsel %vm189, %v184, 0
        %193 = vmatprep.subr.mxu0 0.0
        %194 = vmatpush1.msra.mxu0 0.0
        %195 = vmatprep.subr.mxu0 0.0
        %196 = vmatpush1.msra.mxu0 0.0
        %197 = vmatprep.subr.mxu0 0.0
        %198 = vmatpush1.msra.mxu0 0.0
        %199 = vmatprep.subr.mxu0 0.0
        %200 = vmatpush1.msra.mxu0 0.0
        %201 = vmatprep.subr.mxu0 0.0
        %202 = vmatpush1.msra.mxu0 0.0
        %203 = vmatprep.subr.mxu0 0.0
        %204 = vmatpush1.msra.mxu0 0.0
        %205 = vmatprep.subr.mxu0 0.0
        %206 = vmatpush1.msra.mxu0 0.0
        %207 = vmatprep.subr.mxu0 0.0
        %208 = vmatpush1.msra.mxu0 0.0
        %209 = vmatprep.subr.mxu0 0.0
        %210 = vmatpush1.msra.mxu0 0.0
        %211 = vmatprep.subr.mxu0 0.0
        %212 = vmatpush1.msra.mxu0 0.0
        %213 = vmatprep.subr.mxu0 0.0
        %214 = vmatpush1.msra.mxu0 0.0
        %215 = vmatprep.subr.mxu0 0.0
        %216 = vmatpush1.msra.mxu0 0.0
        %217 = vmatprep.subr.mxu0 0.0
        %218 = vmatpush1.msra.mxu0 0.0
        %219 = vmatprep.subr.mxu0 0.0
        %220 = vmatpush1.msra.mxu0 0.0
        %221 = vmatprep.subr.mxu0 0.0
        %222 = vmatpush1.msra.mxu0 0.0
        %223 = vmatprep.subr.mxu0 0.0
        %224 = vmatpush1.msra.mxu0 %v191
        %225 = vmatprep.subr.mxu0 0.0
        %226 = vmatpush2.msra.mxu0 0.0
        %227 = vmatprep.subr.mxu0 0.0
        %228 = vmatpush2.msra.mxu0 0.0
        %229 = vmatprep.subr.mxu0 0.0
        %230 = vmatpush2.msra.mxu0 0.0
        %231 = vmatprep.subr.mxu0 0.0
        %232 = vmatpush2.msra.mxu0 0.0
        %233 = vmatprep.subr.mxu0 0.0
        %234 = vmatpush2.msra.mxu0 0.0
        %235 = vmatprep.subr.mxu0 0.0
        %236 = vmatpush2.msra.mxu0 0.0
        %237 = vmatprep.subr.mxu0 0.0
        %238 = vmatpush2.msra.mxu0 0.0
        %239 = vmatprep.subr.mxu0 0.0
        %240 = vmatpush2.msra.mxu0 0.0
        %241 = vmatprep.subr.mxu0 0.0
        %242 = vmatpush2.msra.mxu0 0.0
        %243 = vmatprep.subr.mxu0 0.0
        %244 = vmatpush2.msra.mxu0 0.0
        %245 = vmatprep.subr.mxu0 0.0
        %246 = vmatpush2.msra.mxu0 0.0
        %247 = vmatprep.subr.mxu0 0.0
        %248 = vmatpush2.msra.mxu0 0.0
        %249 = vmatprep.subr.mxu0 0.0
        %250 = vmatpush2.msra.mxu0 0.0
        %251 = vmatprep.subr.mxu0 0.0
        %252 = vmatpush2.msra.mxu0 0.0
        %253 = vmatprep.subr.mxu0 0.0
        %254 = vmatpush2.msra.mxu0 0.0
        %255 = vmatprep.subr.mxu0 0.0
        %256 = vmatpush2.msra.mxu0 0.0
        %257 = vmatprep.mubr.f32.mxu0 0.0
        %258 = vmatmul.mubr.f32.gmra.mxu0 %v187
        %v259 = vpop.f32.mrf.mxu0
        %v260 = vadd.f32 0.0, %v259
        %v261 = vpop.f32.mrf.mxu0
        %262 = vdwg.mxu0
        %s263 = scalar_lea.vmem %s0, 4
        %v264 = vld [vmem:[%s263] sm:$0xf]
        %v266 = vsel %vm189, %v264, 0
        %268 = vmatprep.subr.mxu0 0.0
        %269 = vmatpush1.msra.mxu0 0.0
        %270 = vmatprep.subr.mxu0 0.0
        %271 = vmatpush1.msra.mxu0 0.0
        %272 = vmatprep.subr.mxu0 0.0
        %273 = vmatpush1.msra.mxu0 0.0
        %274 = vmatprep.subr.mxu0 0.0
        %275 = vmatpush1.msra.mxu0 0.0
        %276 = vmatprep.subr.mxu0 0.0
        %277 = vmatpush1.msra.mxu0 0.0
        %278 = vmatprep.subr.mxu0 0.0
        %279 = vmatpush1.msra.mxu0 0.0
        %280 = vmatprep.subr.mxu0 0.0
        %281 = vmatpush1.msra.mxu0 0.0
        %282 = vmatprep.subr.mxu0 0.0
        %283 = vmatpush1.msra.mxu0 0.0
        %284 = vmatprep.subr.mxu0 0.0
        %285 = vmatpush1.msra.mxu0 0.0
        %286 = vmatprep.subr.mxu0 0.0
        %287 = vmatpush1.msra.mxu0 0.0
        %288 = vmatprep.subr.mxu0 0.0
        %289 = vmatpush1.msra.mxu0 0.0
        %290 = vmatprep.subr.mxu0 0.0
        %291 = vmatpush1.msra.mxu0 0.0
        %292 = vmatprep.subr.mxu0 0.0
        %293 = vmatpush1.msra.mxu0 0.0
        %294 = vmatprep.subr.mxu0 0.0
        %295 = vmatpush1.msra.mxu0 0.0
        %296 = vmatprep.subr.mxu0 0.0
        %297 = vmatpush1.msra.mxu0 0.0
        %298 = vmatprep.subr.mxu0 0.0
        %299 = vmatpush1.msra.mxu0 %v266
        %300 = vmatprep.subr.mxu0 0.0
        %301 = vmatpush2.msra.mxu0 0.0
        %302 = vmatprep.subr.mxu0 0.0
        %303 = vmatpush2.msra.mxu0 0.0
        %304 = vmatprep.subr.mxu0 0.0
        %305 = vmatpush2.msra.mxu0 0.0
        %306 = vmatprep.subr.mxu0 0.0
        %307 = vmatpush2.msra.mxu0 0.0
        %308 = vmatprep.subr.mxu0 0.0
        %309 = vmatpush2.msra.mxu0 0.0
        %310 = vmatprep.subr.mxu0 0.0
        %311 = vmatpush2.msra.mxu0 0.0
        %312 = vmatprep.subr.mxu0 0.0
        %313 = vmatpush2.msra.mxu0 0.0
        %314 = vmatprep.subr.mxu0 0.0
        %315 = vmatpush2.msra.mxu0 0.0
        %316 = vmatprep.subr.mxu0 0.0
        %317 = vmatpush2.msra.mxu0 0.0
        %318 = vmatprep.subr.mxu0 0.0
        %319 = vmatpush2.msra.mxu0 0.0
        %320 = vmatprep.subr.mxu0 0.0
        %321 = vmatpush2.msra.mxu0 0.0
        %322 = vmatprep.subr.mxu0 0.0
        %323 = vmatpush2.msra.mxu0 0.0
        %324 = vmatprep.subr.mxu0 0.0
        %325 = vmatpush2.msra.mxu0 0.0
        %326 = vmatprep.subr.mxu0 0.0
        %327 = vmatpush2.msra.mxu0 0.0
        %328 = vmatprep.subr.mxu0 0.0
        %329 = vmatpush2.msra.mxu0 0.0
        %330 = vmatprep.subr.mxu0 0.0
        %331 = vmatpush2.msra.mxu0 0.0
        %332 = vmatprep.mubr.f32.mxu0 0.0
        %333 = vmatmul.mubr.f32.gmra.mxu0 %v187
        %v334 = vpop.f32.mrf.mxu0
        %v335 = vadd.f32 0.0, %v334
        %v336 = vpop.f32.mrf.mxu0
        %337 = vdwg.mxu0
        %s338 = scalar_lea.vmem %s0, 8
        %v339 = vld [vmem:[%s338] sm:$0xf]
        %v341 = vsel %vm189, %v339, 0
        %343 = vmatprep.subr.mxu0 0.0
        %344 = vmatpush1.msra.mxu0 0.0
        %345 = vmatprep.subr.mxu0 0.0
        %346 = vmatpush1.msra.mxu0 0.0
        %347 = vmatprep.subr.mxu0 0.0
        %348 = vmatpush1.msra.mxu0 0.0
        %349 = vmatprep.subr.mxu0 0.0
        %350 = vmatpush1.msra.mxu0 0.0
        %351 = vmatprep.subr.mxu0 0.0
        %352 = vmatpush1.msra.mxu0 0.0
        %353 = vmatprep.subr.mxu0 0.0
        %354 = vmatpush1.msra.mxu0 0.0
        %355 = vmatprep.subr.mxu0 0.0
        %356 = vmatpush1.msra.mxu0 0.0
        %357 = vmatprep.subr.mxu0 0.0
        %358 = vmatpush1.msra.mxu0 0.0
        %359 = vmatprep.subr.mxu0 0.0
        %360 = vmatpush1.msra.mxu0 0.0
        %361 = vmatprep.subr.mxu0 0.0
        %362 = vmatpush1.msra.mxu0 0.0
        %363 = vmatprep.subr.mxu0 0.0
        %364 = vmatpush1.msra.mxu0 0.0
        %365 = vmatprep.subr.mxu0 0.0
        %366 = vmatpush1.msra.mxu0 0.0
        %367 = vmatprep.subr.mxu0 0.0
        %368 = vmatpush1.msra.mxu0 0.0
        %369 = vmatprep.subr.mxu0 0.0
        %370 = vmatpush1.msra.mxu0 0.0
        %371 = vmatprep.subr.mxu0 0.0
        %372 = vmatpush1.msra.mxu0 0.0
        %373 = vmatprep.subr.mxu0 0.0
        %374 = vmatpush1.msra.mxu0 %v341
        %375 = vmatprep.subr.mxu0 0.0
        %376 = vmatpush2.msra.mxu0 0.0
        %377 = vmatprep.subr.mxu0 0.0
        %378 = vmatpush2.msra.mxu0 0.0
        %379 = vmatprep.subr.mxu0 0.0
        %380 = vmatpush2.msra.mxu0 0.0
        %381 = vmatprep.subr.mxu0 0.0
        %382 = vmatpush2.msra.mxu0 0.0
        %383 = vmatprep.subr.mxu0 0.0
        %384 = vmatpush2.msra.mxu0 0.0
        %385 = vmatprep.subr.mxu0 0.0
        %386 = vmatpush2.msra.mxu0 0.0
        %387 = vmatprep.subr.mxu0 0.0
        %388 = vmatpush2.msra.mxu0 0.0
        %389 = vmatprep.subr.mxu0 0.0
        %390 = vmatpush2.msra.mxu0 0.0
        %391 = vmatprep.subr.mxu0 0.0
        %392 = vmatpush2.msra.mxu0 0.0
        %393 = vmatprep.subr.mxu0 0.0
        %394 = vmatpush2.msra.mxu0 0.0
        %395 = vmatprep.subr.mxu0 0.0
        %396 = vmatpush2.msra.mxu0 0.0
        %397 = vmatprep.subr.mxu0 0.0
        %398 = vmatpush2.msra.mxu0 0.0
        %399 = vmatprep.subr.mxu0 0.0
        %400 = vmatpush2.msra.mxu0 0.0
        %401 = vmatprep.subr.mxu0 0.0
        %402 = vmatpush2.msra.mxu0 0.0
        %403 = vmatprep.subr.mxu0 0.0
        %404 = vmatpush2.msra.mxu0 0.0
        %405 = vmatprep.subr.mxu0 0.0
        %406 = vmatpush2.msra.mxu0 0.0
        %407 = vmatprep.mubr.f32.mxu0 0.0
        %408 = vmatmul.mubr.f32.gmra.mxu0 %v187
        %v409 = vpop.f32.mrf.mxu0
        %v410 = vadd.f32 0.0, %v409
        %v411 = vpop.f32.mrf.mxu0
        %412 = vdwg.mxu0
        %s413 = scalar_lea.vmem %s0, 12
        %v414 = vld [vmem:[%s413] sm:$0xf]
        %v416 = vsel %vm189, %v414, 0
        %418 = vmatprep.subr.mxu0 0.0
        %419 = vmatpush1.msra.mxu0 0.0
        %420 = vmatprep.subr.mxu0 0.0
        %421 = vmatpush1.msra.mxu0 0.0
        %422 = vmatprep.subr.mxu0 0.0
        %423 = vmatpush1.msra.mxu0 0.0
        %424 = vmatprep.subr.mxu0 0.0
        %425 = vmatpush1.msra.mxu0 0.0
        %426 = vmatprep.subr.mxu0 0.0
        %427 = vmatpush1.msra.mxu0 0.0
        %428 = vmatprep.subr.mxu0 0.0
        %429 = vmatpush1.msra.mxu0 0.0
        %430 = vmatprep.subr.mxu0 0.0
        %431 = vmatpush1.msra.mxu0 0.0
        %432 = vmatprep.subr.mxu0 0.0
        %433 = vmatpush1.msra.mxu0 0.0
        %434 = vmatprep.subr.mxu0 0.0
        %435 = vmatpush1.msra.mxu0 0.0
        %436 = vmatprep.subr.mxu0 0.0
        %437 = vmatpush1.msra.mxu0 0.0
        %438 = vmatprep.subr.mxu0 0.0
        %439 = vmatpush1.msra.mxu0 0.0
        %440 = vmatprep.subr.mxu0 0.0
        %441 = vmatpush1.msra.mxu0 0.0
        %442 = vmatprep.subr.mxu0 0.0
        %443 = vmatpush1.msra.mxu0 0.0
        %444 = vmatprep.subr.mxu0 0.0
        %445 = vmatpush1.msra.mxu0 0.0
        %446 = vmatprep.subr.mxu0 0.0
        %447 = vmatpush1.msra.mxu0 0.0
        %448 = vmatprep.subr.mxu0 0.0
        %449 = vmatpush1.msra.mxu0 %v416
        %450 = vmatprep.subr.mxu0 0.0
        %451 = vmatpush2.msra.mxu0 0.0
        %452 = vmatprep.subr.mxu0 0.0
        %453 = vmatpush2.msra.mxu0 0.0
        %454 = vmatprep.subr.mxu0 0.0
        %455 = vmatpush2.msra.mxu0 0.0
        %456 = vmatprep.subr.mxu0 0.0
        %457 = vmatpush2.msra.mxu0 0.0
        %458 = vmatprep.subr.mxu0 0.0
        %459 = vmatpush2.msra.mxu0 0.0
        %460 = vmatprep.subr.mxu0 0.0
        %461 = vmatpush2.msra.mxu0 0.0
        %462 = vmatprep.subr.mxu0 0.0
        %463 = vmatpush2.msra.mxu0 0.0
        %464 = vmatprep.subr.mxu0 0.0
        %465 = vmatpush2.msra.mxu0 0.0
        %466 = vmatprep.subr.mxu0 0.0
        %467 = vmatpush2.msra.mxu0 0.0
        %468 = vmatprep.subr.mxu0 0.0
        %469 = vmatpush2.msra.mxu0 0.0
        %470 = vmatprep.subr.mxu0 0.0
        %471 = vmatpush2.msra.mxu0 0.0
        %472 = vmatprep.subr.mxu0 0.0
        %473 = vmatpush2.msra.mxu0 0.0
        %474 = vmatprep.subr.mxu0 0.0
        %475 = vmatpush2.msra.mxu0 0.0
        %476 = vmatprep.subr.mxu0 0.0
        %477 = vmatpush2.msra.mxu0 0.0
        %478 = vmatprep.subr.mxu0 0.0
        %479 = vmatpush2.msra.mxu0 0.0
        %480 = vmatprep.subr.mxu0 0.0
        %481 = vmatpush2.msra.mxu0 0.0
        %482 = vmatprep.mubr.f32.mxu0 0.0
        %483 = vmatmul.mubr.f32.gmra.mxu0 %v187
        %v484 = vpop.f32.mrf.mxu0
        %v485 = vadd.f32 0.0, %v484
        %v486 = vpop.f32.mrf.mxu0
        %487 = vdwg.mxu0
        %s488 = scalar_lea.vmem %s0, 16
        %v489 = vld [vmem:[%s488] sm:$0xf]
        %v491 = vsel %vm189, %v489, 0
        %493 = vmatprep.subr.mxu0 0.0
        %494 = vmatpush1.msra.mxu0 0.0
        %495 = vmatprep.subr.mxu0 0.0
        %496 = vmatpush1.msra.mxu0 0.0
        %497 = vmatprep.subr.mxu0 0.0
        %498 = vmatpush1.msra.mxu0 0.0
        %499 = vmatprep.subr.mxu0 0.0
        %500 = vmatpush1.msra.mxu0 0.0
        %501 = vmatprep.subr.mxu0 0.0
        %502 = vmatpush1.msra.mxu0 0.0
        %503 = vmatprep.subr.mxu0 0.0
        %504 = vmatpush1.msra.mxu0 0.0
        %505 = vmatprep.subr.mxu0 0.0
        %506 = vmatpush1.msra.mxu0 0.0
        %507 = vmatprep.subr.mxu0 0.0
        %508 = vmatpush1.msra.mxu0 0.0
        %509 = vmatprep.subr.mxu0 0.0
        %510 = vmatpush1.msra.mxu0 0.0
        %511 = vmatprep.subr.mxu0 0.0
        %512 = vmatpush1.msra.mxu0 0.0
        %513 = vmatprep.subr.mxu0 0.0
        %514 = vmatpush1.msra.mxu0 0.0
        %515 = vmatprep.subr.mxu0 0.0
        %516 = vmatpush1.msra.mxu0 0.0
        %517 = vmatprep.subr.mxu0 0.0
        %518 = vmatpush1.msra.mxu0 0.0
        %519 = vmatprep.subr.mxu0 0.0
        %520 = vmatpush1.msra.mxu0 0.0
        %521 = vmatprep.subr.mxu0 0.0
        %522 = vmatpush1.msra.mxu0 0.0
        %523 = vmatprep.subr.mxu0 0.0
        %524 = vmatpush1.msra.mxu0 %v491
        %525 = vmatprep.subr.mxu0 0.0
        %526 = vmatpush2.msra.mxu0 0.0
        %527 = vmatprep.subr.mxu0 0.0
        %528 = vmatpush2.msra.mxu0 0.0
        %529 = vmatprep.subr.mxu0 0.0
        %530 = vmatpush2.msra.mxu0 0.0
        %531 = vmatprep.subr.mxu0 0.0
        %532 = vmatpush2.msra.mxu0 0.0
        %533 = vmatprep.subr.mxu0 0.0
        %534 = vmatpush2.msra.mxu0 0.0
        %535 = vmatprep.subr.mxu0 0.0
        %536 = vmatpush2.msra.mxu0 0.0
        %537 = vmatprep.subr.mxu0 0.0
        %538 = vmatpush2.msra.mxu0 0.0
        %539 = vmatprep.subr.mxu0 0.0
        %540 = vmatpush2.msra.mxu0 0.0
        %541 = vmatprep.subr.mxu0 0.0
        %542 = vmatpush2.msra.mxu0 0.0
        %543 = vmatprep.subr.mxu0 0.0
        %544 = vmatpush2.msra.mxu0 0.0
        %545 = vmatprep.subr.mxu0 0.0
        %546 = vmatpush2.msra.mxu0 0.0
        %547 = vmatprep.subr.mxu0 0.0
        %548 = vmatpush2.msra.mxu0 0.0
        %549 = vmatprep.subr.mxu0 0.0
        %550 = vmatpush2.msra.mxu0 0.0
        %551 = vmatprep.subr.mxu0 0.0
        %552 = vmatpush2.msra.mxu0 0.0
        %553 = vmatprep.subr.mxu0 0.0
        %554 = vmatpush2.msra.mxu0 0.0
        %555 = vmatprep.subr.mxu0 0.0
        %556 = vmatpush2.msra.mxu0 0.0
        %557 = vmatprep.mubr.f32.mxu0 0.0
        %558 = vmatmul.mubr.f32.gmra.mxu0 %v187
        %v559 = vpop.f32.mrf.mxu0
        %v560 = vadd.f32 0.0, %v559
        %v561 = vpop.f32.mrf.mxu0
        %562 = vdwg.mxu0
        %s563 = scalar_lea.vmem %s0, 20
        %v564 = vld [vmem:[%s563] sm:$0xf]
        %v566 = vsel %vm189, %v564, 0
        %568 = vmatprep.subr.mxu0 0.0
        %569 = vmatpush1.msra.mxu0 0.0
        %570 = vmatprep.subr.mxu0 0.0
        %571 = vmatpush1.msra.mxu0 0.0
        %572 = vmatprep.subr.mxu0 0.0
        %573 = vmatpush1.msra.mxu0 0.0
        %574 = vmatprep.subr.mxu0 0.0
        %575 = vmatpush1.msra.mxu0 0.0
        %576 = vmatprep.subr.mxu0 0.0
        %577 = vmatpush1.msra.mxu0 0.0
        %578 = vmatprep.subr.mxu0 0.0
        %579 = vmatpush1.msra.mxu0 0.0
        %580 = vmatprep.subr.mxu0 0.0
        %581 = vmatpush1.msra.mxu0 0.0
        %582 = vmatprep.subr.mxu0 0.0
        %583 = vmatpush1.msra.mxu0 0.0
        %584 = vmatprep.subr.mxu0 0.0
        %585 = vmatpush1.msra.mxu0 0.0
        %586 = vmatprep.subr.mxu0 0.0
        %587 = vmatpush1.msra.mxu0 0.0
        %588 = vmatprep.subr.mxu0 0.0
        %589 = vmatpush1.msra.mxu0 0.0
        %590 = vmatprep.subr.mxu0 0.0
        %591 = vmatpush1.msra.mxu0 0.0
        %592 = vmatprep.subr.mxu0 0.0
        %593 = vmatpush1.msra.mxu0 0.0
        %594 = vmatprep.subr.mxu0 0.0
        %595 = vmatpush1.msra.mxu0 0.0
        %596 = vmatprep.subr.mxu0 0.0
        %597 = vmatpush1.msra.mxu0 0.0
        %598 = vmatprep.subr.mxu0 0.0
        %599 = vmatpush1.msra.mxu0 %v566
        %600 = vmatprep.subr.mxu0 0.0
        %601 = vmatpush2.msra.mxu0 0.0
        %602 = vmatprep.subr.mxu0 0.0
        %603 = vmatpush2.msra.mxu0 0.0
        %604 = vmatprep.subr.mxu0 0.0
        %605 = vmatpush2.msra.mxu0 0.0
        %606 = vmatprep.subr.mxu0 0.0
        %607 = vmatpush2.msra.mxu0 0.0
        %608 = vmatprep.subr.mxu0 0.0
        %609 = vmatpush2.msra.mxu0 0.0
        %610 = vmatprep.subr.mxu0 0.0
        %611 = vmatpush2.msra.mxu0 0.0
        %612 = vmatprep.subr.mxu0 0.0
        %613 = vmatpush2.msra.mxu0 0.0
        %614 = vmatprep.subr.mxu0 0.0
        %615 = vmatpush2.msra.mxu0 0.0
        %616 = vmatprep.subr.mxu0 0.0
        %617 = vmatpush2.msra.mxu0 0.0
        %618 = vmatprep.subr.mxu0 0.0
        %619 = vmatpush2.msra.mxu0 0.0
        %620 = vmatprep.subr.mxu0 0.0
        %621 = vmatpush2.msra.mxu0 0.0
        %622 = vmatprep.subr.mxu0 0.0
        %623 = vmatpush2.msra.mxu0 0.0
        %624 = vmatprep.subr.mxu0 0.0
        %625 = vmatpush2.msra.mxu0 0.0
        %626 = vmatprep.subr.mxu0 0.0
        %627 = vmatpush2.msra.mxu0 0.0
        %628 = vmatprep.subr.mxu0 0.0
        %629 = vmatpush2.msra.mxu0 0.0
        %630 = vmatprep.subr.mxu0 0.0
        %631 = vmatpush2.msra.mxu0 0.0
        %632 = vmatprep.mubr.f32.mxu0 0.0
        %633 = vmatmul.mubr.f32.gmra.mxu0 %v187
        %v634 = vpop.f32.mrf.mxu0
        %v635 = vadd.f32 0.0, %v634
        %v636 = vpop.f32.mrf.mxu0
        %637 = vdwg.mxu0
        %s638 = scalar_lea.vmem %s0, 24
        %v639 = vld [vmem:[%s638] sm:$0xf]
        %v641 = vsel %vm189, %v639, 0
        %643 = vmatprep.subr.mxu0 0.0
        %644 = vmatpush1.msra.mxu0 0.0
        %645 = vmatprep.subr.mxu0 0.0
        %646 = vmatpush1.msra.mxu0 0.0
        %647 = vmatprep.subr.mxu0 0.0
        %648 = vmatpush1.msra.mxu0 0.0
        %649 = vmatprep.subr.mxu0 0.0
        %650 = vmatpush1.msra.mxu0 0.0
        %651 = vmatprep.subr.mxu0 0.0
        %652 = vmatpush1.msra.mxu0 0.0
        %653 = vmatprep.subr.mxu0 0.0
        %654 = vmatpush1.msra.mxu0 0.0
        %655 = vmatprep.subr.mxu0 0.0
        %656 = vmatpush1.msra.mxu0 0.0
        %657 = vmatprep.subr.mxu0 0.0
        %658 = vmatpush1.msra.mxu0 0.0
        %659 = vmatprep.subr.mxu0 0.0
        %660 = vmatpush1.msra.mxu0 0.0
        %661 = vmatprep.subr.mxu0 0.0
        %662 = vmatpush1.msra.mxu0 0.0
        %663 = vmatprep.subr.mxu0 0.0
        %664 = vmatpush1.msra.mxu0 0.0
        %665 = vmatprep.subr.mxu0 0.0
        %666 = vmatpush1.msra.mxu0 0.0
        %667 = vmatprep.subr.mxu0 0.0
        %668 = vmatpush1.msra.mxu0 0.0
        %669 = vmatprep.subr.mxu0 0.0
        %670 = vmatpush1.msra.mxu0 0.0
        %671 = vmatprep.subr.mxu0 0.0
        %672 = vmatpush1.msra.mxu0 0.0
        %673 = vmatprep.subr.mxu0 0.0
        %674 = vmatpush1.msra.mxu0 %v641
        %675 = vmatprep.subr.mxu0 0.0
        %676 = vmatpush2.msra.mxu0 0.0
        %677 = vmatprep.subr.mxu0 0.0
        %678 = vmatpush2.msra.mxu0 0.0
        %679 = vmatprep.subr.mxu0 0.0
        %680 = vmatpush2.msra.mxu0 0.0
        %681 = vmatprep.subr.mxu0 0.0
        %682 = vmatpush2.msra.mxu0 0.0
        %683 = vmatprep.subr.mxu0 0.0
        %684 = vmatpush2.msra.mxu0 0.0
        %685 = vmatprep.subr.mxu0 0.0
        %686 = vmatpush2.msra.mxu0 0.0
        %687 = vmatprep.subr.mxu0 0.0
        %688 = vmatpush2.msra.mxu0 0.0
        %689 = vmatprep.subr.mxu0 0.0
        %690 = vmatpush2.msra.mxu0 0.0
        %691 = vmatprep.subr.mxu0 0.0
        %692 = vmatpush2.msra.mxu0 0.0
        %693 = vmatprep.subr.mxu0 0.0
        %694 = vmatpush2.msra.mxu0 0.0
        %695 = vmatprep.subr.mxu0 0.0
        %696 = vmatpush2.msra.mxu0 0.0
        %697 = vmatprep.subr.mxu0 0.0
        %698 = vmatpush2.msra.mxu0 0.0
        %699 = vmatprep.subr.mxu0 0.0
        %700 = vmatpush2.msra.mxu0 0.0
        %701 = vmatprep.subr.mxu0 0.0
        %702 = vmatpush2.msra.mxu0 0.0
        %703 = vmatprep.subr.mxu0 0.0
        %704 = vmatpush2.msra.mxu0 0.0
        %705 = vmatprep.subr.mxu0 0.0
        %706 = vmatpush2.msra.mxu0 0.0
        %707 = vmatprep.mubr.f32.mxu0 0.0
        %708 = vmatmul.mubr.f32.gmra.mxu0 %v187
        %v709 = vpop.f32.mrf.mxu0
        %v710 = vadd.f32 0.0, %v709
        %v711 = vpop.f32.mrf.mxu0
        %712 = vdwg.mxu0
        %s713 = scalar_lea.vmem %s0, 28
        %v714 = vld [vmem:[%s713] sm:$0xf]
        %v716 = vsel %vm189, %v714, 0
        %718 = vmatprep.subr.mxu0 0.0
        %719 = vmatpush1.msra.mxu0 0.0
        %720 = vmatprep.subr.mxu0 0.0
        %721 = vmatpush1.msra.mxu0 0.0
        %722 = vmatprep.subr.mxu0 0.0
        %723 = vmatpush1.msra.mxu0 0.0
        %724 = vmatprep.subr.mxu0 0.0
        %725 = vmatpush1.msra.mxu0 0.0
        %726 = vmatprep.subr.mxu0 0.0
        %727 = vmatpush1.msra.mxu0 0.0
        %728 = vmatprep.subr.mxu0 0.0
        %729 = vmatpush1.msra.mxu0 0.0
        %730 = vmatprep.subr.mxu0 0.0
        %731 = vmatpush1.msra.mxu0 0.0
        %732 = vmatprep.subr.mxu0 0.0
        %733 = vmatpush1.msra.mxu0 0.0
        %734 = vmatprep.subr.mxu0 0.0
        %735 = vmatpush1.msra.mxu0 0.0
        %736 = vmatprep.subr.mxu0 0.0
        %737 = vmatpush1.msra.mxu0 0.0
        %738 = vmatprep.subr.mxu0 0.0
        %739 = vmatpush1.msra.mxu0 0.0
        %740 = vmatprep.subr.mxu0 0.0
        %741 = vmatpush1.msra.mxu0 0.0
        %742 = vmatprep.subr.mxu0 0.0
        %743 = vmatpush1.msra.mxu0 0.0
        %744 = vmatprep.subr.mxu0 0.0
        %745 = vmatpush1.msra.mxu0 0.0
        %746 = vmatprep.subr.mxu0 0.0
        %747 = vmatpush1.msra.mxu0 0.0
        %748 = vmatprep.subr.mxu0 0.0
        %749 = vmatpush1.msra.mxu0 %v716
        %750 = vmatprep.subr.mxu0 0.0
        %751 = vmatpush2.msra.mxu0 0.0
        %752 = vmatprep.subr.mxu0 0.0
        %753 = vmatpush2.msra.mxu0 0.0
        %754 = vmatprep.subr.mxu0 0.0
        %755 = vmatpush2.msra.mxu0 0.0
        %756 = vmatprep.subr.mxu0 0.0
        %757 = vmatpush2.msra.mxu0 0.0
        %758 = vmatprep.subr.mxu0 0.0
        %759 = vmatpush2.msra.mxu0 0.0
        %760 = vmatprep.subr.mxu0 0.0
        %761 = vmatpush2.msra.mxu0 0.0
        %762 = vmatprep.subr.mxu0 0.0
        %763 = vmatpush2.msra.mxu0 0.0
        %764 = vmatprep.subr.mxu0 0.0
        %765 = vmatpush2.msra.mxu0 0.0
        %766 = vmatprep.subr.mxu0 0.0
        %767 = vmatpush2.msra.mxu0 0.0
        %768 = vmatprep.subr.mxu0 0.0
        %769 = vmatpush2.msra.mxu0 0.0
        %770 = vmatprep.subr.mxu0 0.0
        %771 = vmatpush2.msra.mxu0 0.0
        %772 = vmatprep.subr.mxu0 0.0
        %773 = vmatpush2.msra.mxu0 0.0
        %774 = vmatprep.subr.mxu0 0.0
        %775 = vmatpush2.msra.mxu0 0.0
        %776 = vmatprep.subr.mxu0 0.0
        %777 = vmatpush2.msra.mxu0 0.0
        %778 = vmatprep.subr.mxu0 0.0
        %779 = vmatpush2.msra.mxu0 0.0
        %780 = vmatprep.subr.mxu0 0.0
        %781 = vmatpush2.msra.mxu0 0.0
        %782 = vmatprep.mubr.f32.mxu0 0.0
        %783 = vmatmul.mubr.f32.gmra.mxu0 %v187
        %v784 = vpop.f32.mrf.mxu0
        %v785 = vadd.f32 0.0, %v784
        %v786 = vpop.f32.mrf.mxu0
        %787 = vdwg.mxu0
        %s788 = scalar_lea.vmem %s0, 32
        %v789 = vld [vmem:[%s788] sm:$0xf]
        %v791 = vsel %vm189, %v789, 0
        %793 = vmatprep.subr.mxu0 0.0
        %794 = vmatpush1.msra.mxu0 0.0
        %795 = vmatprep.subr.mxu0 0.0
        %796 = vmatpush1.msra.mxu0 0.0
        %797 = vmatprep.subr.mxu0 0.0
        %798 = vmatpush1.msra.mxu0 0.0
        %799 = vmatprep.subr.mxu0 0.0
        %800 = vmatpush1.msra.mxu0 0.0
        %801 = vmatprep.subr.mxu0 0.0
        %802 = vmatpush1.msra.mxu0 0.0
        %803 = vmatprep.subr.mxu0 0.0
        %804 = vmatpush1.msra.mxu0 0.0
        %805 = vmatprep.subr.mxu0 0.0
        %806 = vmatpush1.msra.mxu0 0.0
        %807 = vmatprep.subr.mxu0 0.0
        %808 = vmatpush1.msra.mxu0 0.0
        %809 = vmatprep.subr.mxu0 0.0
        %810 = vmatpush1.msra.mxu0 0.0
        %811 = vmatprep.subr.mxu0 0.0
        %812 = vmatpush1.msra.mxu0 0.0
        %813 = vmatprep.subr.mxu0 0.0
        %814 = vmatpush1.msra.mxu0 0.0
        %815 = vmatprep.subr.mxu0 0.0
        %816 = vmatpush1.msra.mxu0 0.0
        %817 = vmatprep.subr.mxu0 0.0
        %818 = vmatpush1.msra.mxu0 0.0
        %819 = vmatprep.subr.mxu0 0.0
        %820 = vmatpush1.msra.mxu0 0.0
        %821 = vmatprep.subr.mxu0 0.0
        %822 = vmatpush1.msra.mxu0 0.0
        %823 = vmatprep.subr.mxu0 0.0
        %824 = vmatpush1.msra.mxu0 %v791
        %825 = vmatprep.subr.mxu0 0.0
        %826 = vmatpush2.msra.mxu0 0.0
        %827 = vmatprep.subr.mxu0 0.0
        %828 = vmatpush2.msra.mxu0 0.0
        %829 = vmatprep.subr.mxu0 0.0
        %830 = vmatpush2.msra.mxu0 0.0
        %831 = vmatprep.subr.mxu0 0.0
        %832 = vmatpush2.msra.mxu0 0.0
        %833 = vmatprep.subr.mxu0 0.0
        %834 = vmatpush2.msra.mxu0 0.0
        %835 = vmatprep.subr.mxu0 0.0
        %836 = vmatpush2.msra.mxu0 0.0
        %837 = vmatprep.subr.mxu0 0.0
        %838 = vmatpush2.msra.mxu0 0.0
        %839 = vmatprep.subr.mxu0 0.0
        %840 = vmatpush2.msra.mxu0 0.0
        %841 = vmatprep.subr.mxu0 0.0
        %842 = vmatpush2.msra.mxu0 0.0
        %843 = vmatprep.subr.mxu0 0.0
        %844 = vmatpush2.msra.mxu0 0.0
        %845 = vmatprep.subr.mxu0 0.0
        %846 = vmatpush2.msra.mxu0 0.0
        %847 = vmatprep.subr.mxu0 0.0
        %848 = vmatpush2.msra.mxu0 0.0
        %849 = vmatprep.subr.mxu0 0.0
        %850 = vmatpush2.msra.mxu0 0.0
        %851 = vmatprep.subr.mxu0 0.0
        %852 = vmatpush2.msra.mxu0 0.0
        %853 = vmatprep.subr.mxu0 0.0
        %854 = vmatpush2.msra.mxu0 0.0
        %855 = vmatprep.subr.mxu0 0.0
        %856 = vmatpush2.msra.mxu0 0.0
        %857 = vmatprep.mubr.f32.mxu0 0.0
        %858 = vmatmul.mubr.f32.gmra.mxu0 %v187
        %v859 = vpop.f32.mrf.mxu0
        %v860 = vadd.f32 0.0, %v859
        %v861 = vpop.f32.mrf.mxu0
        %862 = vdwg.mxu0
        %v863 = vadd.f32 %v260, %v335
        %v864 = vadd.f32 %v863, %v410
        %v865 = vadd.f32 %v864, %v485
        %v866 = vadd.f32 %v865, %v560
        %v867 = vadd.f32 %v866, %v635
        %v868 = vadd.f32 %v867, %v710
        %v869 = vadd.f32 %v868, %v785
        %v870 = vadd.f32 %v869, %v860
        %v871 = vmul.f32 %v870, 0.11111111
        %v872 = vsub.f32 %v260, %v871
        %v873 = vsub.f32 %v335, %v871
        %v874 = vsub.f32 %v410, %v871
        %v875 = vsub.f32 %v485, %v871
        %v876 = vsub.f32 %v560, %v871
        %v877 = vsub.f32 %v635, %v871
        %v878 = vsub.f32 %v710, %v871
        %v879 = vsub.f32 %v785, %v871
        %v880 = vsub.f32 %v860, %v871
        %v881 = vmul.f32 %v872, %v872
        %v882 = vmul.f32 %v873, %v873
        %v883 = vadd.f32 %v881, %v882
        %v884 = vmul.f32 %v874, %v874
        %v885 = vadd.f32 %v883, %v884
        %v886 = vmul.f32 %v875, %v875
        %v887 = vadd.f32 %v885, %v886
        %v888 = vmul.f32 %v876, %v876
        %v889 = vadd.f32 %v887, %v888
        %v890 = vmul.f32 %v877, %v877
        %v891 = vadd.f32 %v889, %v890
        %v892 = vmul.f32 %v878, %v878
        %v893 = vadd.f32 %v891, %v892
        %v894 = vmul.f32 %v879, %v879
        %v895 = vadd.f32 %v893, %v894
        %v896 = vmul.f32 %v880, %v880
        %v897 = vadd.f32 %v895, %v896
        %v898 = vmul.f32 %v897, 0.11111111
        %v899 = vadd.f32 %v898, 1e-05
        %v900 = vrsqrt.pop %v899
        %v901 = vmul.f32 %v872, %v900
        %v902 = vmul.f32 %v873, %v900
        %v903 = vmul.f32 %v874, %v900
        %v904 = vmul.f32 %v875, %v900
        %v905 = vmul.f32 %v876, %v900
        %v906 = vmul.f32 %v877, %v900
        %v907 = vmul.f32 %v878, %v900
        %v908 = vmul.f32 %v879, %v900
        %v909 = vmul.f32 %v880, %v900
        %v910 = vmul.f32 %v901, %v901
        %911 = vadd.xlane.f32.xlu0 %v910
        %v912 = vpop.xlane.xlu0 %911
        %v913 = vmul.f32 %v902, %v902
        %914 = vadd.xlane.f32.xlu0 %v913
        %v915 = vpop.xlane.xlu0 %914
        %v916 = vadd.f32 %v912, %v915
        %v917 = vmul.f32 %v903, %v903
        %918 = vadd.xlane.f32.xlu0 %v917
        %v919 = vpop.xlane.xlu0 %918
        %v920 = vadd.f32 %v916, %v919
        %v921 = vmul.f32 %v904, %v904
        %922 = vadd.xlane.f32.xlu0 %v921
        %v923 = vpop.xlane.xlu0 %922
        %v924 = vadd.f32 %v920, %v923
        %v925 = vmul.f32 %v905, %v905
        %926 = vadd.xlane.f32.xlu0 %v925
        %v927 = vpop.xlane.xlu0 %926
        %v928 = vadd.f32 %v924, %v927
        %v929 = vmul.f32 %v906, %v906
        %930 = vadd.xlane.f32.xlu0 %v929
        %v931 = vpop.xlane.xlu0 %930
        %v932 = vadd.f32 %v928, %v931
        %v933 = vmul.f32 %v907, %v907
        %934 = vadd.xlane.f32.xlu0 %v933
        %v935 = vpop.xlane.xlu0 %934
        %v936 = vadd.f32 %v932, %v935
        %v937 = vmul.f32 %v908, %v908
        %938 = vadd.xlane.f32.xlu0 %v937
        %v939 = vpop.xlane.xlu0 %938
        %v940 = vadd.f32 %v936, %v939
        %v941 = vmul.f32 %v909, %v909
        %942 = vadd.xlane.f32.xlu0 %v941
        %v943 = vpop.xlane.xlu0 %942
        %v944 = vadd.f32 %v940, %v943
        %v945 = vmul.f32 %v944, 0.0061728396
        %v946 = vld [vmem:[%s182] sm:$0xff]
        %v947 = vadd.f32 %v945, 1e-05
        %v948 = vrsqrt.pop %v947
        %v949 = vmul.f32 %v946, %v948
        %951 = vset.pattern.permute.xlu0 0
        %952 = vperm.xlu0 %951, %v949
        %v953 = vpop.permute.xlu0 %952
        %v955 = vmul.f32 %v901, %v953
        %957 = vset.pattern.permute.xlu0 1
        %958 = vperm.xlu0 %957, %v946
        %v959 = vpop.permute.xlu0 %958
        %v961 = vadd.f32 %v955, %v959
        %v962 = vmax.f32 %v961, 0.0
        %963 = vst [vmem:[%s174] sm:$0xff] %v962
        %v964 = vmul.f32 %v902, %v953
        %v965 = vadd.f32 %v964, %v959
        %v966 = vmax.f32 %v965, 0.0
        %s967 = scalar_lea.vmem %s174, 8 [#allocation2]
        %968 = vst [vmem:[%s967] sm:$0xff] %v966
        %v969 = vmul.f32 %v903, %v953
        %v970 = vadd.f32 %v969, %v959
        %v971 = vmax.f32 %v970, 0.0
        %s972 = scalar_lea.vmem %s174, 16 [#allocation2]
        %973 = vst [vmem:[%s972] sm:$0xff] %v971
        %v974 = vmul.f32 %v904, %v953
        %v975 = vadd.f32 %v974, %v959
        %v976 = vmax.f32 %v975, 0.0
        %s977 = scalar_lea.vmem %s174, 24 [#allocation2]
        %978 = vst [vmem:[%s977] sm:$0xff] %v976
        %v979 = vmul.f32 %v905, %v953
        %v980 = vadd.f32 %v979, %v959
        %v981 = vmax.f32 %v980, 0.0
        %s982 = scalar_lea.vmem %s174, 32 [#allocation2]
        %983 = vst [vmem:[%s982] sm:$0xff] %v981
        %v984 = vmul.f32 %v906, %v953
        %v985 = vadd.f32 %v984, %v959
        %v986 = vmax.f32 %v985, 0.0
        %s987 = scalar_lea.vmem %s174, 40 [#allocation2]
        %988 = vst [vmem:[%s987] sm:$0xff] %v986
        %v989 = vmul.f32 %v907, %v953
        %v990 = vadd.f32 %v989, %v959
        %v991 = vmax.f32 %v990, 0.0
        %s992 = scalar_lea.vmem %s174, 48 [#allocation2]
        %993 = vst [vmem:[%s992] sm:$0xff] %v991
        %v994 = vmul.f32 %v908, %v953
        %v995 = vadd.f32 %v994, %v959
        %v996 = vmax.f32 %v995, 0.0
        %s997 = scalar_lea.vmem %s174, 56 [#allocation2]
        %998 = vst [vmem:[%s997] sm:$0xff] %v996
        %v999 = vmul.f32 %v909, %v953
        %v1000 = vadd.f32 %v999, %v959
        %v1001 = vmax.f32 %v1000, 0.0
        %s1002 = scalar_lea.vmem %s174, 64 [#allocation2]
        %1003 = vst [vmem:[%s1002] sm:$0xff] %v1001
        %s1004 = sand.u32 %s98, 1
        %s1005 = scalar_lea.sflag [#allocation3], %s1004
        %s1006 = sand.u32 %s98, 1
        %s1007 = smul.addr %s1006, 72
        %s1008 = scalar_lea.vmem [#allocation2], %s1007
        // Predicated region
        $region33: #{tpu_custom_call.1} parent=31 // pred_check
          %p1009 = pneg %p108
        $region34: #{tpu_custom_call.1} parent=31 // pred_check_branch
          %1011 = sbr.rel (%p1009) target = $region36
        $region35: #{tpu_custom_call.1} parent=31 // pred_region
          %s1013 = ssub.s32 1152, 1152
          %1014 = vsyncadd %s1005, %s1013
          %s1015 = smul.addr %s17, 128
          %s1016 = scalar_lea.hbm %s3, %s1015
          %s1017 = sshll.u32 %s1008, 4
          %s1018 = int_to_ptr.vmem [resolvable:$true] %s1017
          %1023 = dma.vmem_to_hbm [thread:$0]  %s1018, 1152, %s1016, %s1005, 128, 512, 8
        $region36: #{tpu_custom_call.1} parent=31 // pred_fallthru
          _
      $region32: #{tpu_custom_call.1} parent=5 // pred_fallthru
        _
      %p1024 = scmp.le.s32.totalorder 2, %s12
      // Predicated region
      $region37: #{tpu_custom_call.1} parent=5 // pred_check
        %p1025 = pneg %p1024
      $region38: #{tpu_custom_call.1} parent=5 // pred_check_branch
        %1027 = sbr.rel (%p1025) target = $region40
      $region39: #{tpu_custom_call.1} parent=5 // pred_region
        %s1028 = ssub.s32 %s12, 2
        // Predicated region
        $region41: #{tpu_custom_call.1} parent=39 // pred_check
          %p1029 = pneg %p114
        $region42: #{tpu_custom_call.1} parent=39 // pred_check_branch
          %1031 = sbr.rel (%p1029) target = $region44
        $region43: #{tpu_custom_call.1} parent=39 // pred_region
          %s1032 = sand.u32 %s99, 1
          %s1033 = scalar_lea.sflag [#allocation3], %s1032
          %s1034 = sand.u32 %s99, 1
          %s1035 = smul.addr %s1034, 72
          %s1036 = scalar_lea.vmem [#allocation2], %s1035
          %1037 = dma.done %s1033, 1152
        $region44: #{tpu_custom_call.1} parent=39 // pred_fallthru
          _
      $region40: #{tpu_custom_call.1} parent=5 // pred_fallthru
        _
    $region6: #{tpu_custom_call.1} parent=1 // loop_footer
      %s16 = sadd.s32 1, %s12
    $region7: #{tpu_custom_call.1} parent=1 // loop_footer_branch
      %11 = sbr.rel target = $region3
    $region8: #{tpu_custom_call.1} parent=1 // loop_exit
      _
    %1038 = vsyncpa [#allocation3], 1
    %s1039 = scalar_lea.sflag [#allocation3], 1
    %1040 = vsyncpa %s1039, 1

</llo_original>
